<compile_context>
chip_gen: v5e
topology: v5e:2x2
jax: 0.10.0
libtpu: 0.0.40
codegen_flags: <defaults>
</compile_context>

<pallas_src>
import functools
import math

import jax
import jax.numpy as jnp
from jax.experimental import pallas as pl
from jax.experimental.pallas import tpu as pltpu

# WingLoss constants (w=5, e=2)
W_WING = 5.0
E_WING = 2.0
C_WING = W_WING - W_WING * math.log(1.0 + W_WING / E_WING)

LANE = 128            # lane width
SUB = 8               # sublane group
ALIGN = SUB * LANE    # 1024-element alignment for the [R, 128] flattening
MAX_TILE_ROWS = 2048  # rows of 128 lanes per grid step (1 MiB f32 per input block)


def _corner_loss_kernel(p_ref, t_ref, acc_ref, *, tile_rows, steps,
                        valid_rows, needs_mask):
    """Masked WingLoss partial sums over one (tile_rows, LANE) tile.

    Accumulates sublane-grouped (8, 128) partials into the partition's
    VMEM-resident output block.
    """
    part = pl.program_id(0)   # parallel partition (megacore on v7x)
    j = pl.program_id(1)      # sequential step within the partition

    @pl.when(j == 0)
    def _():
        acc_ref[...] = jnp.zeros_like(acc_ref)

    x = p_ref[...]
    t = t_ref[...]

    # WingLoss. t == -1 encodes both the original sentinel and non-fg / padded
    # positions: weight = 0 => diff = 0 => y = w*log(1) = 0.
    diff = jnp.where(t == -1.0, 0.0, x - t)
    a = jnp.abs(diff)
    y = jnp.where(a < W_WING,
                  W_WING * jnp.log(1.0 + a * (1.0 / E_WING)),
                  a - C_WING)

    if needs_mask:  # static: only traced when the tiling is ragged
        blk = part * steps + j  # logical (un-clamped) row-block index
        row = (jax.lax.broadcasted_iota(jnp.int32, (tile_rows, LANE), 0)
               + blk * tile_rows)
        y = jnp.where(row < valid_rows, y, 0.0)

    # Sublane-grouped partial sum: pure VPU adds across (8,128) tiles.
    acc_ref[...] += y.reshape(-1, SUB, LANE).sum(axis=0)


def corner_loss(pred, target, score_sum, fg_mask):
    """Pallas implementation of CornerLoss.forward.

    pred, target: [B, N, 8] float32
    score_sum:    scalar (float)
    fg_mask:      [B, N] bool
    """
    B, N, K = pred.shape
    assert K == 8

    # Fold fg_mask into target via the -1 sentinel; pred passes through untouched.
    p = pred.astype(jnp.float32).reshape(-1)
    t = jnp.where(fg_mask[..., None], target.astype(jnp.float32), -1.0).reshape(-1)

    L = p.shape[0]
    pad = (-L) % ALIGN
    if pad:
        # Only for sizes not divisible by 1024 (typical YOLOv6 shapes skip this).
        p = jnp.pad(p, (0, pad))
        t = jnp.pad(t, (0, pad), constant_values=-1.0)  # sentinel => contributes 0
    R = (L + pad) // LANE                 # rows of 128 lanes; multiple of 8
    p2 = p.reshape(R, LANE)               # metadata-only reshape
    t2 = t.reshape(R, LANE)

    tile_rows = min(MAX_TILE_ROWS, R)     # multiple of 8, <= R
    T = pl.cdiv(R, tile_rows)             # total row-blocks
    P = 2 if T >= 2 else 1                # partitions (both TCs on v7x)
    S = pl.cdiv(T, P)                     # steps per partition
    needs_mask = (P * S * tile_rows != R)

    def in_map(part, j):
        # Clamp out-of-range steps onto the last real block; their contribution
        # is zeroed in-kernel via the logical-row mask.
        return (jnp.minimum(part * S + j, T - 1), 0)

    kernel = functools.partial(
        _corner_loss_kernel,
        tile_rows=tile_rows, steps=S, valid_rows=R, needs_mask=needs_mask)

    partial_sums = pl.pallas_call(
        kernel,
        out_shape=jax.ShapeDtypeStruct((P * SUB, LANE), jnp.float32),
        grid_spec=pltpu.PrefetchScalarGridSpec(
            num_scalar_prefetch=0,
            grid=(P, S),
            in_specs=[
                pl.BlockSpec((tile_rows, LANE), in_map),
                pl.BlockSpec((tile_rows, LANE), in_map),
            ],
            out_specs=pl.BlockSpec((SUB, LANE), lambda part, j: (part, 0)),
        ),
        compiler_params=pltpu.CompilerParams(
            dimension_semantics=("parallel", "arbitrary")),
    )(p2, t2)

    total = jnp.sum(partial_sums)

    score_sum = jnp.asarray(score_sum, jnp.float32)
    num_pos = jnp.sum(fg_mask)
    denom = jnp.where(score_sum == 0.0, 8.0, 8.0 * score_sum)
    return jnp.where(num_pos > 0, total / denom, jnp.float32(0.0))


def _corner_loss_ref(pred, target, score_sum, fg_mask):
    """Pure-JAX reference (same math as the PyTorch module)."""
    weight = jnp.where(target == -1.0, 0.0, 1.0)
    diff = weight * (pred - target)
    a = jnp.abs(diff)
    flag = jnp.where(a < W_WING, 1.0, 0.0)
    y = flag * W_WING * jnp.log(1.0 + a / E_WING) \
        + (1.0 - flag) * (a - C_WING)
    m = fg_mask.astype(jnp.float32)[..., None]
    total = jnp.sum(y * m)
    score_sum = jnp.asarray(score_sum, jnp.float32)
    denom = jnp.where(score_sum == 0.0, 8.0, 8.0 * score_sum)
    num_pos = jnp.sum(fg_mask.astype(jnp.float32))
    return jnp.where(num_pos > 0, total / denom, 0.0)


if __name__ == "__main__":
    key = jax.random.PRNGKey(0)
    k1, k2, k3, k4 = jax.random.split(key, 4)

    # Small shapes consistent with the module: [B, N, 8] corners, [B, N] fg mask.
    B, N = 2, 64
    pred = jax.random.normal(k1, (B, N, 8), jnp.float32) * 4.0
    target = jax.random.normal(k2, (B, N, 8), jnp.float32) * 4.0
    # sprinkle some -1 targets to exercise the WingLoss weight-zeroing path
    neg_mask = jax.random.bernoulli(k3, 0.1, (B, N, 8))
    target = jnp.where(neg_mask, -1.0, target)
    fg_mask = jax.random.bernoulli(k4, 0.5, (B, N))
    score_sum = jnp.float32(3.0)

    out = jax.block_until_ready(corner_loss(pred, target, score_sum, fg_mask))
    ref = _corner_loss_ref(pred, target, score_sum, fg_mask)
    assert jnp.allclose(out, ref, rtol=1e-5, atol=1e-5), (out, ref)

    # score_sum == 0 branch
    out0 = jax.block_until_ready(corner_loss(pred, target, 0.0, fg_mask))
    ref0 = _corner_loss_ref(pred, target, 0.0, fg_mask)
    assert jnp.allclose(out0, ref0, rtol=1e-5, atol=1e-5), (out0, ref0)

    # Moderate YOLO-like shape to exercise multi-block, two-partition and
    # ragged-tail masking paths.
    kk = jax.random.split(jax.random.PRNGKey(1), 4)
    B2, N2 = 4, 8400
    pred2 = jax.random.normal(kk[0], (B2, N2, 8), jnp.float32) * 4.0
    target2 = jax.random.normal(kk[1], (B2, N2, 8), jnp.float32) * 4.0
    target2 = jnp.where(jax.random.bernoulli(kk[2], 0.1, (B2, N2, 8)), -1.0, target2)
    fg2 = jax.random.bernoulli(kk[3], 0.05, (B2, N2))
    out2 = jax.block_until_ready(corner_loss(pred2, target2, 7.5, fg2))
    ref2 = _corner_loss_ref(pred2, target2, 7.5, fg2)
    assert jnp.allclose(out2, ref2, rtol=1e-4, atol=1e-3), (out2, ref2)

    print("KERNEL_OK")
</pallas_src>

<mosaic_0001>
module attributes {stable_mosaic.version = 11 : i64} {
  func.func @_corner_loss_kernel(%arg0: i32, %arg1: i32, %arg2: memref<8x128xf32, #tpu.memory_space<vmem>>, %arg3: memref<8x128xf32, #tpu.memory_space<vmem>>, %arg4: memref<8x128xf32, #tpu.memory_space<vmem>>) attributes {dimension_semantics = [#tpu.dimension_semantics<parallel>, #tpu.dimension_semantics<arbitrary>], iteration_bounds = array<i64: 1, 1>, scalar_prefetch = 0 : i64, scratch_operands = 0 : i64, tpu.core_type = #tpu.core_type<tc>, window_params = [{transform_indices = @transform_0, window_bounds = array<i64: 8, 128>}, {transform_indices = @transform_1, window_bounds = array<i64: 8, 128>}, {transform_indices = @transform_2, window_bounds = array<i64: 8, 128>}]} {
    %c0_i32 = arith.constant 0 : i32
    %0 = arith.cmpi eq, %arg1, %c0_i32 : i32
    %1 = arith.extui %0 : i1 to i32
    %c0_i32_0 = arith.constant 0 : i32
    %2 = arith.cmpi ne, %1, %c0_i32_0 : i32
    scf.if %2 {
      %cst_15 = arith.constant 0.000000e+00 : f32
      %28 = vector.broadcast %cst_15 : f32 to vector<8x128xf32>
      %c0_16 = arith.constant 0 : index
      %c0_17 = arith.constant 0 : index
      %29 = vector.load %arg4[%c0_16, %c0_17] : memref<8x128xf32, #tpu.memory_space<vmem>>, vector<8x128xf32>
      tpu.vector_store %arg4[%c0_16, %c0_17], %28 {strides = array<i32>} : memref<8x128xf32, #tpu.memory_space<vmem>>, vector<8x128xf32>,
    } else {
    }
    %c0 = arith.constant 0 : index
    %c0_1 = arith.constant 0 : index
    %3 = vector.load %arg2[%c0, %c0_1] : memref<8x128xf32, #tpu.memory_space<vmem>>, vector<8x128xf32>
    %c0_2 = arith.constant 0 : index
    %c0_3 = arith.constant 0 : index
    %4 = vector.load %arg3[%c0_2, %c0_3] : memref<8x128xf32, #tpu.memory_space<vmem>>, vector<8x128xf32>
    %cst = arith.constant -1.000000e+00 : f32
    %5 = vector.broadcast %cst : f32 to vector<8x128xf32>
    %6 = arith.cmpf oeq, %4, %5 : vector<8x128xf32>
    %7 = arith.subf %3, %4 : vector<8x128xf32>
    %cst_4 = arith.constant 0.000000e+00 : f32
    %8 = vector.broadcast %cst_4 : f32 to vector<8x128xf32>
    %9 = arith.select %6, %8, %7 : vector<8x128xi1>, vector<8x128xf32>
    %10 = math.absf %9 : vector<8x128xf32>
    %cst_5 = arith.constant 5.000000e+00 : f32
    %11 = vector.broadcast %cst_5 : f32 to vector<8x128xf32>
    %12 = arith.cmpf olt, %10, %11 : vector<8x128xf32>
    %cst_6 = arith.constant 5.000000e-01 : f32
    %13 = vector.broadcast %cst_6 : f32 to vector<8x128xf32>
    %14 = arith.mulf %10, %13 : vector<8x128xf32>
    %cst_7 = arith.constant 1.000000e+00 : f32
    %15 = vector.broadcast %cst_7 : f32 to vector<8x128xf32>
    %16 = arith.addf %15, %14 : vector<8x128xf32>
    %17 = math.log %16 : vector<8x128xf32>
    %cst_8 = arith.constant 5.000000e+00 : f32
    %18 = vector.broadcast %cst_8 : f32 to vector<8x128xf32>
    %19 = arith.mulf %18, %17 : vector<8x128xf32>
    %cst_9 = arith.constant -1.26381481 : f32
    %20 = vector.broadcast %cst_9 : f32 to vector<8x128xf32>
    %21 = arith.subf %10, %20 : vector<8x128xf32>
    %22 = arith.select %12, %19, %21 : vector<8x128xi1>, vector<8x128xf32>
    %c0_10 = arith.constant 0 : index
    %c0_11 = arith.constant 0 : index
    %23 = vector.load %arg4[%c0_10, %c0_11] : memref<8x128xf32, #tpu.memory_space<vmem>>, vector<8x128xf32>
    %24 = vector.shape_cast %22 : vector<8x128xf32> to vector<1x8x128xf32>
    %cst_12 = arith.constant dense<0.000000e+00> : vector<8x128xf32>
    %25 = vector.multi_reduction <add>, %24, %cst_12 [0] : vector<1x8x128xf32> to vector<8x128xf32>
    %26 = arith.addf %23, %25 : vector<8x128xf32>
    %c0_13 = arith.constant 0 : index
    %c0_14 = arith.constant 0 : index
    %27 = vector.load %arg4[%c0_13, %c0_14] : memref<8x128xf32, #tpu.memory_space<vmem>>, vector<8x128xf32>
    tpu.vector_store %arg4[%c0_13, %c0_14], %26 {strides = array<i32>} : memref<8x128xf32, #tpu.memory_space<vmem>>, vector<8x128xf32>,
    return
  }
  func.func @transform_0(%arg0: i32, %arg1: i32) -> (i32, i32) {
    %c1_i32 = arith.constant 1 : i32
    %0 = arith.muli %arg0, %c1_i32 : i32
    %1 = arith.addi %0, %arg1 : i32
    %c0_i32 = arith.constant 0 : i32
    %2 = arith.minsi %1, %c0_i32 : i32
    %c0_i32_0 = arith.constant 0 : i32
    %c0_i32_1 = arith.constant 0 : i32
    return %2, %c0_i32_0 : i32, i32
  }
  func.func @transform_1(%arg0: i32, %arg1: i32) -> (i32, i32) {
    %c1_i32 = arith.constant 1 : i32
    %0 = arith.muli %arg0, %c1_i32 : i32
    %1 = arith.addi %0, %arg1 : i32
    %c0_i32 = arith.constant 0 : i32
    %2 = arith.minsi %1, %c0_i32 : i32
    %c0_i32_0 = arith.constant 0 : i32
    %c0_i32_1 = arith.constant 0 : i32
    return %2, %c0_i32_0 : i32, i32
  }
  func.func @transform_2(%arg0: i32, %arg1: i32) -> (i32, i32) {
    %c0_i32 = arith.constant 0 : i32
    %c0_i32_0 = arith.constant 0 : i32
    return %arg0, %c0_i32 : i32, i32
  }
}

</mosaic_0001>

<llo_original>
// kernel: tpu_custom_call.1
$region0: #{tpu_custom_call.1}
  #allocation0 [shape = 'u32[]', space=smem, size = 0x4, offset = 0x4, fixed_abs, tag = 'smem constant byte address 0x4 - core index']
  #allocation1 [shape = 'u32[72,128]{1,0:T(1,128)}', space=vmem, size = 0x9000, scoped, tag = 'internal scratch']
  %s0 = inlined_call_operand.hbm [shape: f32[8,128], index: 0, kind: input, shape index: {}]
  %s1 = inlined_call_operand.hbm [shape: f32[8,128], index: 1, kind: input, shape index: {}]
  %s2 = inlined_call_operand.hbm [shape: f32[8,128], index: 2, kind: output, shape index: {}]
  %s3 = sld [smem:[#allocation0]]
  $region30: #{tpu_custom_call.1} parent=0
    _
  %s5 = ssub.s32 1, %s3
  %s6 = scalar_select 0, %s5, %s3
  $region1: #{tpu_custom_call.1} parent=0
    #allocation2 [shape = 'u8[4096]{0}', space=vmem, size = 0x1000, scoped, tag = 'input window, operand 0, single buffered']
    #allocation3 [shape = 's32[1]{0}', space=sflag, size = 0x4, scoped, tag = 'scoped memory for tpu_custom_call.1']
    #allocation4 [shape = 's32[1]{0}', space=sflag, size = 0x4, scoped, tag = 'scoped memory for tpu_custom_call.1']
    #allocation5 [shape = 'u8[4096]{0}', space=vmem, size = 0x1000, scoped, tag = 'input window, operand 1, single buffered']
    #allocation6 [shape = 's32[1]{0}', space=sflag, size = 0x4, scoped, tag = 'scoped memory for tpu_custom_call.1']
    #allocation7 [shape = 'u8[4096]{0}', space=vmem, size = 0x1000, scoped, tag = 'output window, operand 0, single buffered']
    %7 = vsyncpa [#allocation3], 0
    %8 = vsyncpa [#allocation6], 0
    %9 = vsyncpa [#allocation4], 0
    // Predicated region
    $region2: #{tpu_custom_call.1} parent=1 // pred_check
      _
    $region3: #{tpu_custom_call.1} parent=1 // pred_check_branch
      %11 = sbr.rel (0) target = $region5
    $region4: #{tpu_custom_call.1} parent=1 // pred_region
      %s12 = sadd.s32 0, 0
      %p13 = scmp.lt.s32.totalorder %s12, 0
      %s14 = scalar_select %p13, %s12, 0
      %16 = vsyncadd [#allocation3], 0
      %s17 = smul.addr %s14, 8
      %s18 = scalar_lea.hbm %s0, %s17
      %s20 = sshll.u32 %s18, 4
      %s21 = int_to_ptr.hbm [resolvable:$true] %s20
      %s22 = sshll.u32 [#allocation2], 4
      %s23 = int_to_ptr.vmem [resolvable:$true] %s22
      %25 = dma.hbm_to_vmem [thread:$0]  %s21, 128, %s23, [#allocation3]
    $region5: #{tpu_custom_call.1} parent=1 // pred_fallthru
      _
    // Predicated region
    $region6: #{tpu_custom_call.1} parent=1 // pred_check
      _
    $region7: #{tpu_custom_call.1} parent=1 // pred_check_branch
      %27 = sbr.rel (0) target = $region9
    $region8: #{tpu_custom_call.1} parent=1 // pred_region
      %s28 = sadd.s32 0, 0
      %p29 = scmp.lt.s32.totalorder %s28, 0
      %s30 = scalar_select %p29, %s28, 0
      %32 = vsyncadd [#allocation6], 0
      %s33 = smul.addr %s30, 8
      %s34 = scalar_lea.hbm %s1, %s33
      %s36 = sshll.u32 %s34, 4
      %s37 = int_to_ptr.hbm [resolvable:$true] %s36
      %s38 = sshll.u32 [#allocation5], 4
      %s39 = int_to_ptr.vmem [resolvable:$true] %s38
      %41 = dma.hbm_to_vmem [thread:$0]  %s37, 128, %s39, [#allocation6]
    $region9: #{tpu_custom_call.1} parent=1 // pred_fallthru
      _
    // Predicated region
    $region10: #{tpu_custom_call.1} parent=1 // pred_check
      _
    $region11: #{tpu_custom_call.1} parent=1 // pred_check_branch
      %43 = sbr.rel (0) target = $region13
    $region12: #{tpu_custom_call.1} parent=1 // pred_region
      %45 = dma.done [#allocation3], 128
    $region13: #{tpu_custom_call.1} parent=1 // pred_fallthru
      _
    // Predicated region
    $region14: #{tpu_custom_call.1} parent=1 // pred_check
      _
    $region15: #{tpu_custom_call.1} parent=1 // pred_check_branch
      %47 = sbr.rel (0) target = $region17
    $region16: #{tpu_custom_call.1} parent=1 // pred_region
      %49 = dma.done [#allocation6], 128
    $region17: #{tpu_custom_call.1} parent=1 // pred_fallthru
      _
    %s50 = sadd.s32 0, 0
    %p51 = scmp.lt.s32.totalorder %s50, 0
    %s52 = scalar_select %p51, %s50, 0
    %s53 = sadd.s32 0, 0
    %p54 = scmp.lt.s32.totalorder %s53, 0
    %s55 = scalar_select %p54, %s53, 0
    %p56 = scmp.eq.s32.totalorder 0, 0
    // Predicated region
    $region18: #{tpu_custom_call.1} parent=1 // pred_check
      %p57 = pneg %p56
    $region19: #{tpu_custom_call.1} parent=1 // pred_check_branch
      %59 = sbr.rel (%p57) target = $region21
    $region20: #{tpu_custom_call.1} parent=1 // pred_region
      %60 = vst [vmem:[#allocation7] sm:$0xff] 0.0
    $region21: #{tpu_custom_call.1} parent=1 // pred_fallthru
      _
    %v61 = vld [vmem:[#allocation2] sm:$0xff]
    %v62 = vld [vmem:[#allocation5] sm:$0xff]
    %vm63 = vcmp.eq.f32.partialorder %v62, -1.0
    %v64 = vsub.f32 %v61, %v62
    %v65 = vsel %vm63, 0.0, %v64
    %v66 = vand.u32 2147483647, %v65
    %vm67 = vcmp.lt.f32.partialorder %v66, 5.0
    %v68 = vmul.f32 %v66, 0.5
    %v69 = vadd.f32 %v68, 1.0
    %v70 = vlog2.pop %v69
    %v71 = vmul.f32 %v70, 0.6931472
    %v72 = vmul.f32 %v71, 5.0
    %v73 = vsub.f32 %v66, -1.2638148
    %v74 = vsel %vm67, %v72, %v73
    %v75 = vld [vmem:[#allocation7] sm:$0xff]
    %v76 = vadd.f32 %v74, 0.0
    %v77 = vadd.f32 %v75, %v76
    %78 = vst [vmem:[#allocation7] sm:$0xff] %v77
    // Predicated region
    $region22: #{tpu_custom_call.1} parent=1 // pred_check
      _
    $region23: #{tpu_custom_call.1} parent=1 // pred_check_branch
      %80 = sbr.rel (0) target = $region25
    $region24: #{tpu_custom_call.1} parent=1 // pred_region
      %82 = vsyncadd [#allocation4], 0
      %s84 = sshll.u32 [#allocation7], 4
      %s85 = int_to_ptr.vmem [resolvable:$true] %s84
      %s86 = sshll.u32 %s2, 4
      %s87 = int_to_ptr.hbm [resolvable:$true] %s86
      %89 = dma.vmem_to_hbm [thread:$0]  %s85, 128, %s87, [#allocation4]
    $region25: #{tpu_custom_call.1} parent=1 // pred_fallthru
      _
    // Predicated region
    $region26: #{tpu_custom_call.1} parent=1 // pred_check
      _
    $region27: #{tpu_custom_call.1} parent=1 // pred_check_branch
      %91 = sbr.rel (0) target = $region29
    $region28: #{tpu_custom_call.1} parent=1 // pred_region
      %93 = dma.done [#allocation4], 128
    $region29: #{tpu_custom_call.1} parent=1 // pred_fallthru
      _
    %94 = vsyncpa [#allocation3], 1
    %95 = vsyncpa [#allocation6], 1
    %96 = vsyncpa [#allocation4], 1

</llo_original>
